<compile_context>
chip_gen: v7x
topology: tpu7x:2x2x1
jax: 0.10.0
libtpu: 0.0.40
codegen_flags: <defaults>
</compile_context>

<pallas_src>
import math

import jax
import jax.numpy as jnp
from jax.experimental import pallas as pl
from jax.experimental.pallas import tpu as pltpu

# ---- Small synthetic "config" (ViT-style) ----------------------------------
BATCH = 2
SEQ = 8
HIDDEN = 32            # config.hidden_size
MLP_DIM = 128          # config.transformer['mlp_dim']
SQRT_HALF = 1.0 / math.sqrt(2.0)


# ---- Exact (erf-based) GELU, matching torch.nn.functional.gelu default ------
def _erf_poly(z):
    """Abramowitz & Stegun 7.1.26 erf approximation, |err| <= 1.5e-7 in f32.

    exp + approx-reciprocal go to the EUP slot; the rest is cheap VPU work.
    """
    p = 0.3275911
    a1, a2, a3, a4, a5 = (0.254829592, -0.284496736, 1.421413741,
                          -1.453152027, 1.061405429)
    az = jnp.abs(z)
    t = pl.reciprocal(1.0 + p * az, approx=True)          # EUP, not VPU divide
    poly = ((((a5 * t + a4) * t + a3) * t + a2) * t + a1) * t
    e = 1.0 - poly * jnp.exp(-az * az)
    return jnp.where(z < 0.0, -e, e)


def _gelu_exact(x):
    # GELU(x) = 0.5 * x * (1 + erf(x / sqrt(2)))  (torch default, approximate='none')
    return 0.5 * x * (1.0 + _erf_poly(x * SQRT_HALF))


# ---- Pallas kernel: one row-tile of the MLP per grid step -------------------
def mlp_kernel(x_ref, w1_ref, b1_ref, w2_ref, b2_ref, o_ref):
    # x_ref: (TM, H) f32; w1: (H, M) bf16; b1: (1, M) f32;
    # w2: (M, H) bf16; b2: (1, H) f32; o: (TM, H) f32
    x = x_ref[...]
    # fc1: bf16 MXU operands, f32 accumulation.
    h = jnp.dot(x.astype(jnp.bfloat16), w1_ref[...],
                preferred_element_type=jnp.float32) + b1_ref[...]
    h = _gelu_exact(h)                       # f32 VPU/EUP math
    # dropout: eval mode => identity
    # fc2: bf16 MXU operands, f32 accumulation.
    o = jnp.dot(h.astype(jnp.bfloat16), w2_ref[...],
                preferred_element_type=jnp.float32) + b2_ref[...]
    # dropout: eval mode => identity
    o_ref[...] = o.astype(o_ref.dtype)


def _round_up(a, b):
    return (a + b - 1) // b * b


# ---- Wrapper ----------------------------------------------------------------
@jax.jit
def mlp_forward(x, w1, b1, w2, b2):
    B, S, H = x.shape
    M = w1.shape[1]
    rows = B * S

    # Row tile: whole slab for tiny inputs (single invocation, no per-step
    # overhead); 256-row tiles once the slab is big enough that pipelining and
    # VMEM residency matter (256 = multiple of 8 sublanes and of the 256-wide
    # v6e/v7x MXU; also fine on v5e's 128-wide MXU).
    tm = rows if rows <= 256 else 256
    rows_p = _round_up(rows, tm)

    x2d = x.reshape(rows, H)
    if rows_p != rows:
        x2d = jnp.pad(x2d, ((0, rows_p - rows), (0, 0)))

    # bf16 weights: halves HBM->VMEM weight DMA; accumulation stays f32.
    w1b = w1.astype(jnp.bfloat16)
    w2b = w2.astype(jnp.bfloat16)

    grid = (rows_p // tm,)

    # Explicit VMEM budget with headroom (re-derived per tile so the same code
    # is safe on v7x's 64 MiB VMEM as well as v5e/v6e's 128 MiB).
    vmem_bytes = (
        2 * tm * H * 4                 # x tile, double-buffered (f32)
        + 2 * tm * H * 4               # out tile, double-buffered (f32)
        + 2 * (H * M + M * H) * 2      # bf16 weights (generously x2)
        + 2 * (M + H) * 4              # biases
        + 4 * tm * M * 4               # f32/bf16 intermediates headroom
    )
    vmem_limit = int(min(100 * 2**20, max(32 * 2**20, 2 * vmem_bytes)))

    cost = pl.CostEstimate(
        flops=2 * rows * (H * M + M * H),
        transcendentals=2 * rows * M,              # exp + approx-reciprocal
        bytes_accessed=(rows * H * 4               # x in
                        + (H * M + M * H) * 2      # bf16 weights
                        + (M + H) * 4              # biases
                        + rows * H * 4),           # out
    )

    out2d = pl.pallas_call(
        mlp_kernel,
        out_shape=jax.ShapeDtypeStruct((rows_p, H), x.dtype),
        grid_spec=pltpu.PrefetchScalarGridSpec(
            num_scalar_prefetch=0,
            grid=grid,
            in_specs=[
                pl.BlockSpec((tm, H), lambda i: (i, 0)),   # x row tile
                pl.BlockSpec((H, M), lambda i: (0, 0)),    # w1 (resident)
                pl.BlockSpec((1, M), lambda i: (0, 0)),    # b1 (resident)
                pl.BlockSpec((M, H), lambda i: (0, 0)),    # w2 (resident)
                pl.BlockSpec((1, H), lambda i: (0, 0)),    # b2 (resident)
            ],
            out_specs=pl.BlockSpec((tm, H), lambda i: (i, 0)),
        ),
        compiler_params=pltpu.CompilerParams(
            dimension_semantics=("parallel",),             # 2 TCs on v7x
            vmem_limit_bytes=vmem_limit,
        ),
        cost_estimate=cost,
    )(x2d, w1b, b1, w2b, b2)

    return out2d[:rows].reshape(B, S, H)


# ---- Pure-JAX reference (for a sanity check) --------------------------------
def mlp_reference(x, w1, b1, w2, b2):
    h = jnp.einsum('bsh,hm->bsm', x, w1,
                   precision=jax.lax.Precision.HIGHEST) + b1[0]
    h = jax.nn.gelu(h, approximate=False)      # exact erf-based GELU
    return jnp.einsum('bsm,mh->bsh', h, w2,
                      precision=jax.lax.Precision.HIGHEST) + b2[0]


if __name__ == "__main__":
    key = jax.random.PRNGKey(0)
    keys = jax.random.split(key, 5)

    # Deterministic torch.nn.Linear-like init; weights stored already
    # transposed as (in, out) so the kernel computes y = x @ W + b.
    def lin_params(kw, kb, fan_in, fan_out):
        bound = 1.0 / math.sqrt(fan_in)
        w = jax.random.uniform(kw, (fan_in, fan_out), jnp.float32, -bound, bound)
        b = jax.random.uniform(kb, (1, fan_out), jnp.float32, -bound, bound)
        return w, b

    x = jax.random.normal(keys[0], (BATCH, SEQ, HIDDEN), jnp.float32)
    w1, b1 = lin_params(keys[1], keys[2], HIDDEN, MLP_DIM)
    w2, b2 = lin_params(keys[3], keys[4], MLP_DIM, HIDDEN)

    out = jax.block_until_ready(mlp_forward(x, w1, b1, w2, b2))
    ref = mlp_reference(x, w1, b1, w2, b2)

    assert out.shape == (BATCH, SEQ, HIDDEN)
    # bf16 matmul operands (f32 accumulation) vs the HIGHEST-precision f32
    # reference => loosened tolerance per the performance review.
    assert jnp.allclose(out, ref, atol=3e-2, rtol=3e-2), "mismatch vs reference"

    print("KERNEL_OK")
</pallas_src>

<mosaic_0001>
module attributes {stable_mosaic.version = 11 : i64} {
  func.func @mlp_kernel(%arg0: i32, %arg1: memref<16x32xf32, #tpu.memory_space<vmem>>, %arg2: memref<32x128xbf16, #tpu.memory_space<vmem>>, %arg3: memref<1x128xf32, #tpu.memory_space<vmem>>, %arg4: memref<128x32xbf16, #tpu.memory_space<vmem>>, %arg5: memref<1x32xf32, #tpu.memory_space<vmem>>, %arg6: memref<16x32xf32, #tpu.memory_space<vmem>>) attributes {dimension_semantics = [#tpu.dimension_semantics<parallel>], iteration_bounds = array<i64: 1>, scalar_prefetch = 0 : i64, scratch_operands = 0 : i64, tpu.core_type = #tpu.core_type<tc>, window_params = [{transform_indices = @transform_0, window_bounds = array<i64: 16, 32>}, {pipeline_mode = #tpu.pipeline_mode<synchronous>, transform_indices = @transform_1, window_bounds = array<i64: 32, 128>}, {pipeline_mode = #tpu.pipeline_mode<synchronous>, transform_indices = @transform_2, window_bounds = array<i64: 1, 128>}, {pipeline_mode = #tpu.pipeline_mode<synchronous>, transform_indices = @transform_3, window_bounds = array<i64: 128, 32>}, {pipeline_mode = #tpu.pipeline_mode<synchronous>, transform_indices = @transform_4, window_bounds = array<i64: 1, 32>}, {transform_indices = @transform_5, window_bounds = array<i64: 16, 32>}]} {
    %c0 = arith.constant 0 : index
    %c0_0 = arith.constant 0 : index
    %0 = vector.load %arg1[%c0, %c0_0] : memref<16x32xf32, #tpu.memory_space<vmem>>, vector<16x32xf32>
    %1 = arith.truncf %0 : vector<16x32xf32> to vector<16x32xbf16>
    %c0_1 = arith.constant 0 : index
    %c0_2 = arith.constant 0 : index
    %2 = vector.load %arg2[%c0_1, %c0_2] : memref<32x128xbf16, #tpu.memory_space<vmem>>, vector<32x128xbf16>
    %cst = arith.constant dense<0.000000e+00> : vector<16x128xf32>
    %3 = tpu.matmul %1, %2, %cst {dimension_numbers = #tpu.dot_dimension_numbers<[1], [0], [0], [1], [0, 0, 1, 1], [], []>} : vector<16x32xbf16>, vector<32x128xbf16>, vector<16x128xf32> -> vector<16x128xf32>
    %c0_3 = arith.constant 0 : index
    %c0_4 = arith.constant 0 : index
    %4 = vector.load %arg3[%c0_3, %c0_4] : memref<1x128xf32, #tpu.memory_space<vmem>>, vector<1x128xf32>
    %5 = vector.broadcast %4 : vector<1x128xf32> to vector<16x128xf32>
    %6 = arith.addf %3, %5 : vector<16x128xf32>
    %cst_5 = arith.constant 5.000000e-01 : f32
    %7 = vector.broadcast %cst_5 : f32 to vector<16x128xf32>
    %8 = arith.mulf %7, %6 : vector<16x128xf32>
    %cst_6 = arith.constant 0.707106769 : f32
    %9 = vector.broadcast %cst_6 : f32 to vector<16x128xf32>
    %10 = arith.mulf %6, %9 : vector<16x128xf32>
    %11 = math.absf %10 : vector<16x128xf32>
    %cst_7 = arith.constant 0.327591091 : f32
    %12 = vector.broadcast %cst_7 : f32 to vector<16x128xf32>
    %13 = arith.mulf %12, %11 : vector<16x128xf32>
    %cst_8 = arith.constant 1.000000e+00 : f32
    %14 = vector.broadcast %cst_8 : f32 to vector<16x128xf32>
    %15 = arith.addf %14, %13 : vector<16x128xf32>
    %16 = tpu.reciprocal %15 {approx = true} : vector<16x128xf32> -> vector<16x128xf32>
    %cst_9 = arith.constant 1.06140542 : f32
    %17 = vector.broadcast %cst_9 : f32 to vector<16x128xf32>
    %18 = arith.mulf %17, %16 : vector<16x128xf32>
    %cst_10 = arith.constant -1.45315206 : f32
    %19 = vector.broadcast %cst_10 : f32 to vector<16x128xf32>
    %20 = arith.addf %18, %19 : vector<16x128xf32>
    %21 = arith.mulf %20, %16 : vector<16x128xf32>
    %cst_11 = arith.constant 1.42141378 : f32
    %22 = vector.broadcast %cst_11 : f32 to vector<16x128xf32>
    %23 = arith.addf %21, %22 : vector<16x128xf32>
    %24 = arith.mulf %23, %16 : vector<16x128xf32>
    %cst_12 = arith.constant -0.284496725 : f32
    %25 = vector.broadcast %cst_12 : f32 to vector<16x128xf32>
    %26 = arith.addf %24, %25 : vector<16x128xf32>
    %27 = arith.mulf %26, %16 : vector<16x128xf32>
    %cst_13 = arith.constant 0.254829586 : f32
    %28 = vector.broadcast %cst_13 : f32 to vector<16x128xf32>
    %29 = arith.addf %27, %28 : vector<16x128xf32>
    %30 = arith.mulf %29, %16 : vector<16x128xf32>
    %cst_14 = arith.constant 0.000000e+00 : f32
    %31 = vector.broadcast %cst_14 : f32 to vector<16x128xf32>
    %32 = arith.subf %31, %11 : vector<16x128xf32>
    %33 = arith.mulf %32, %11 : vector<16x128xf32>
    %34 = math.exp %33 : vector<16x128xf32>
    %35 = arith.mulf %30, %34 : vector<16x128xf32>
    %cst_15 = arith.constant 1.000000e+00 : f32
    %36 = vector.broadcast %cst_15 : f32 to vector<16x128xf32>
    %37 = arith.subf %36, %35 : vector<16x128xf32>
    %cst_16 = arith.constant 0.000000e+00 : f32
    %38 = vector.broadcast %cst_16 : f32 to vector<16x128xf32>
    %39 = arith.cmpf olt, %10, %38 : vector<16x128xf32>
    %cst_17 = arith.constant 0.000000e+00 : f32
    %40 = vector.broadcast %cst_17 : f32 to vector<16x128xf32>
    %41 = arith.subf %40, %37 : vector<16x128xf32>
    %42 = arith.select %39, %41, %37 : vector<16x128xi1>, vector<16x128xf32>
    %cst_18 = arith.constant 1.000000e+00 : f32
    %43 = vector.broadcast %cst_18 : f32 to vector<16x128xf32>
    %44 = arith.addf %43, %42 : vector<16x128xf32>
    %45 = arith.mulf %8, %44 : vector<16x128xf32>
    %46 = arith.truncf %45 : vector<16x128xf32> to vector<16x128xbf16>
    %c0_19 = arith.constant 0 : index
    %c0_20 = arith.constant 0 : index
    %47 = vector.load %arg4[%c0_19, %c0_20] : memref<128x32xbf16, #tpu.memory_space<vmem>>, vector<128x32xbf16>
    %cst_21 = arith.constant dense<0.000000e+00> : vector<16x32xf32>
    %48 = tpu.matmul %46, %47, %cst_21 {dimension_numbers = #tpu.dot_dimension_numbers<[1], [0], [0], [1], [0, 0, 1, 1], [], []>} : vector<16x128xbf16>, vector<128x32xbf16>, vector<16x32xf32> -> vector<16x32xf32>
    %c0_22 = arith.constant 0 : index
    %c0_23 = arith.constant 0 : index
    %49 = vector.load %arg5[%c0_22, %c0_23] : memref<1x32xf32, #tpu.memory_space<vmem>>, vector<1x32xf32>
    %50 = vector.broadcast %49 : vector<1x32xf32> to vector<16x32xf32>
    %51 = arith.addf %48, %50 : vector<16x32xf32>
    %c0_24 = arith.constant 0 : index
    %c0_25 = arith.constant 0 : index
    %52 = vector.load %arg6[%c0_24, %c0_25] : memref<16x32xf32, #tpu.memory_space<vmem>>, vector<16x32xf32>
    tpu.vector_store %arg6[%c0_24, %c0_25], %51 {strides = array<i32>} : memref<16x32xf32, #tpu.memory_space<vmem>>, vector<16x32xf32>,
    return
  }
  func.func @transform_0(%arg0: i32) -> (i32, i32) {
    %c0_i32 = arith.constant 0 : i32
    %c0_i32_0 = arith.constant 0 : i32
    return %arg0, %c0_i32 : i32, i32
  }
  func.func @transform_1(%arg0: i32) -> (i32, i32) {
    %c0_i32 = arith.constant 0 : i32
    %c0_i32_0 = arith.constant 0 : i32
    %c0_i32_1 = arith.constant 0 : i32
    return %c0_i32, %c0_i32_0 : i32, i32
  }
  func.func @transform_2(%arg0: i32) -> (i32, i32) {
    %c0_i32 = arith.constant 0 : i32
    %c0_i32_0 = arith.constant 0 : i32
    %c0_i32_1 = arith.constant 0 : i32
    return %c0_i32, %c0_i32_0 : i32, i32
  }
  func.func @transform_3(%arg0: i32) -> (i32, i32) {
    %c0_i32 = arith.constant 0 : i32
    %c0_i32_0 = arith.constant 0 : i32
    %c0_i32_1 = arith.constant 0 : i32
    return %c0_i32, %c0_i32_0 : i32, i32
  }
  func.func @transform_4(%arg0: i32) -> (i32, i32) {
    %c0_i32 = arith.constant 0 : i32
    %c0_i32_0 = arith.constant 0 : i32
    %c0_i32_1 = arith.constant 0 : i32
    return %c0_i32, %c0_i32_0 : i32, i32
  }
  func.func @transform_5(%arg0: i32) -> (i32, i32) {
    %c0_i32 = arith.constant 0 : i32
    %c0_i32_0 = arith.constant 0 : i32
    return %arg0, %c0_i32 : i32, i32
  }
}

</mosaic_0001>

<llo_original>
// kernel: mlp_forward.1
$region0: #{mlp_forward.1}
  #allocation0 [shape = 'u32[]', space=smem, size = 0x4, offset = 0x4, fixed_abs, tag = 'smem constant byte address 0x4 - core index']
  #allocation1 [shape = 'u32[144,128]{1,0:T(1,128)}', space=vmem, size = 0x12000, scoped, tag = 'internal scratch']
  %s0 = inlined_call_operand.vmem [shape: f32[16,32], index: 0, kind: input, shape index: {}]
  %s1 = inlined_call_operand.vmem [shape: bf16[32,128], index: 1, kind: input, shape index: {}]
  %s2 = inlined_call_operand.vmem [shape: f32[1,128], index: 2, kind: input, shape index: {}]
  %s3 = inlined_call_operand.vmem [shape: bf16[128,32], index: 3, kind: input, shape index: {}]
  %s4 = inlined_call_operand.vmem [shape: f32[1,32], index: 4, kind: input, shape index: {}]
  %s5 = inlined_call_operand.hbm [shape: f32[16,32], index: 5, kind: output, shape index: {}]
  %s6 = sld [smem:[#allocation0]]
  $region30: #{mlp_forward.1} parent=0
    _
  %s8 = ssub.s32 1, %s6
  %s9 = scalar_select 0, %s8, %s6
  $region1: #{mlp_forward.1} parent=0
    #allocation2 [shape = 'u8[8192]{0}', space=vmem, size = 0x2000, scoped, tag = 'output window, operand 0, single buffered']
    #allocation3 [shape = 's32[1]{0}', space=sflag, size = 0x4, scoped, tag = 'scoped memory for mlp_forward.1']
    %10 = vsyncpa [#allocation3], 0
    // Predicated region
    $region2: #{mlp_forward.1} parent=1 // pred_check
      _
    $region3: #{mlp_forward.1} parent=1 // pred_check_branch
      %12 = sbr.rel (0) target = $region5
    $region4: #{mlp_forward.1} parent=1 // pred_region
      _
    $region5: #{mlp_forward.1} parent=1 // pred_fallthru
      _
    // Predicated region
    $region6: #{mlp_forward.1} parent=1 // pred_check
      _
    $region7: #{mlp_forward.1} parent=1 // pred_check_branch
      %14 = sbr.rel (0) target = $region9
    $region8: #{mlp_forward.1} parent=1 // pred_region
      _
    $region9: #{mlp_forward.1} parent=1 // pred_fallthru
      _
    // Predicated region
    $region10: #{mlp_forward.1} parent=1 // pred_check
      _
    $region11: #{mlp_forward.1} parent=1 // pred_check_branch
      %16 = sbr.rel (0) target = $region13
    $region12: #{mlp_forward.1} parent=1 // pred_region
      _
    $region13: #{mlp_forward.1} parent=1 // pred_fallthru
      _
    // Predicated region
    $region14: #{mlp_forward.1} parent=1 // pred_check
      _
    $region15: #{mlp_forward.1} parent=1 // pred_check_branch
      %18 = sbr.rel (0) target = $region17
    $region16: #{mlp_forward.1} parent=1 // pred_region
      _
    $region17: #{mlp_forward.1} parent=1 // pred_fallthru
      _
    // Predicated region
    $region18: #{mlp_forward.1} parent=1 // pred_check
      _
    $region19: #{mlp_forward.1} parent=1 // pred_check_branch
      %20 = sbr.rel (0) target = $region21
    $region20: #{mlp_forward.1} parent=1 // pred_region
      _
    $region21: #{mlp_forward.1} parent=1 // pred_fallthru
      _
    %v22 = vld [vmem:[%s0] sm:$0xff]
    %v23 = vld [vmem:[%s0 + $0x8] sm:$0xff]
    %v24 = vpack.c.bf16 %v23, %v22
    %v25 = vld [vmem:[%s1] sm:$0xf]
    %v26 = vld [vmem:[%s1 + $0x4] sm:$0xf]
    %v27 = vld [vmem:[%s1 + $0x8] sm:$0xf]
    %v28 = vld [vmem:[%s1 + $0xc] sm:$0xf]
    %v29 = vld [vmem:[%s2] sm:$0x1]
    %v31 = vlaneseq
    %v32 = vshrl.u32 %v31, 7
    %v33 = vsub.s32 0, %v32
    %v34 = vrot.slane %v29, %v33
    %v40 = vunpack.c.l.b16 %v25
    %v41 = vunpack.c.l.b16 %v26
    %v42 = vunpack.c.l.b16 %v27
    %v43 = vunpack.c.l.b16 %v28
    %v44 = vpack.c.b16 %v41, %v40
    %v45 = vpack.c.b16 %v43, %v42
    %vm48 = vcmask 261120
    %v50 = vsel %vm48, %v24, 0
    %52 = vmatprep.subr.bf16.mxu0 0
    %53 = vmatpush1.bf16.msra.mxu0 %v44
    %54 = vmatprep.subr.bf16.mxu0 0
    %55 = vmatpush1.bf16.msra.mxu0 %v45
    %56 = vmatprep.subr.bf16.mxu0 0
    %57 = vmatpush1.bf16.msra.mxu0 0
    %58 = vmatprep.subr.bf16.mxu0 0
    %59 = vmatpush1.bf16.msra.mxu0 0
    %60 = vmatprep.subr.bf16.mxu0 0
    %61 = vmatpush1.bf16.msra.mxu0 0
    %62 = vmatprep.subr.bf16.mxu0 0
    %63 = vmatpush1.bf16.msra.mxu0 0
    %64 = vmatprep.subr.bf16.mxu0 0
    %65 = vmatpush1.bf16.msra.mxu0 0
    %66 = vmatprep.subr.bf16.mxu0 0
    %67 = vmatpush1.bf16.msra.mxu0 0
    %68 = vmatprep.subr.bf16.mxu0 0
    %69 = vmatpush1.bf16.msra.mxu0 0
    %70 = vmatprep.subr.bf16.mxu0 0
    %71 = vmatpush1.bf16.msra.mxu0 0
    %72 = vmatprep.subr.bf16.mxu0 0
    %73 = vmatpush1.bf16.msra.mxu0 0
    %74 = vmatprep.subr.bf16.mxu0 0
    %75 = vmatpush1.bf16.msra.mxu0 0
    %76 = vmatprep.subr.bf16.mxu0 0
    %77 = vmatpush1.bf16.msra.mxu0 0
    %78 = vmatprep.subr.bf16.mxu0 0
    %79 = vmatpush1.bf16.msra.mxu0 0
    %80 = vmatprep.subr.bf16.mxu0 0
    %81 = vmatpush1.bf16.msra.mxu0 0
    %82 = vmatprep.subr.bf16.mxu0 0
    %83 = vmatpush1.bf16.msra.mxu0 0
    %84 = vmatprep.mubr.bf16.mxu0 0
    %85 = vmatmul.mubr.bf16.gmra.mrb[0].mxu0 %v50
    %v86 = vpop.f32.mrb[0].mxu0
    %v87 = vadd.f32 %v34, %v86
    %v88 = vpop.f32.mrb[0].mxu0
    %v89 = vpop.f32.mrb[0].mxu0
    %v90 = vadd.f32 %v34, %v89
    %v91 = vpop.f32.mrb[0].mxu0
    %92 = vdwg.mxu0
    %v93 = vmul.f32 %v87, 0.5
    %v94 = vmul.f32 %v90, 0.5
    %v95 = vmul.f32 %v87, 0.70710677
    %v96 = vmul.f32 %v90, 0.70710677
    %v97 = vand.u32 2147483647, %v95
    %v98 = vand.u32 2147483647, %v96
    %v99 = vmul.f32 %v97, 0.3275911
    %v100 = vmul.f32 %v98, 0.3275911
    %v101 = vadd.f32 %v99, 1.0
    %v102 = vadd.f32 %v100, 1.0
    %v103 = vrcp.pop %v101
    %v104 = vrcp.pop %v102
    %v105 = vmul.f32 %v103, 1.0614054
    %v106 = vmul.f32 %v104, 1.0614054
    %v107 = vadd.f32 %v105, -1.4531521
    %v108 = vadd.f32 %v106, -1.4531521
    %v109 = vmul.f32 %v107, %v103
    %v110 = vmul.f32 %v108, %v104
    %v111 = vadd.f32 %v109, 1.4214138
    %v112 = vadd.f32 %v110, 1.4214138
    %v113 = vmul.f32 %v111, %v103
    %v114 = vmul.f32 %v112, %v104
    %v115 = vadd.f32 %v113, -0.28449672
    %v116 = vadd.f32 %v114, -0.28449672
    %v117 = vmul.f32 %v115, %v103
    %v118 = vmul.f32 %v116, %v104
    %v119 = vadd.f32 %v117, 0.2548296
    %v120 = vadd.f32 %v118, 0.2548296
    %v121 = vmul.f32 %v119, %v103
    %v122 = vmul.f32 %v120, %v104
    %v123 = vsub.f32 0.0, %v97
    %v124 = vsub.f32 0.0, %v98
    %v125 = vmul.f32 %v123, %v97
    %v126 = vmul.f32 %v124, %v98
    %v127 = vmul.f32 %v125, 1.442695
    %v128 = vpow.pop %v127
    %v129 = vmul.f32 %v126, 1.442695
    %v130 = vpow.pop %v129
    %v131 = vmul.f32 %v121, %v128
    %v132 = vmul.f32 %v122, %v130
    %v133 = vsub.f32 1.0, %v131
    %v134 = vsub.f32 1.0, %v132
    %vm135 = vcmp.lt.f32.partialorder %v95, 0.0
    %vm136 = vcmp.lt.f32.partialorder %v96, 0.0
    %v137 = vsub.f32 0.0, %v133
    %v138 = vsub.f32 0.0, %v134
    %v139 = vsel %vm135, %v137, %v133
    %v140 = vsel %vm136, %v138, %v134
    %v141 = vadd.f32 %v139, 1.0
    %v142 = vadd.f32 %v140, 1.0
    %v143 = vmul.f32 %v93, %v141
    %v144 = vmul.f32 %v94, %v142
    %v145 = vpack.c.bf16 %v144, %v143
    %v146 = vld [vmem:[%s3] sm:$0xf]
    %v147 = vld [vmem:[%s3 + $0x4] sm:$0xf]
    %v148 = vld [vmem:[%s3 + $0x8] sm:$0xf]
    %v149 = vld [vmem:[%s3 + $0xc] sm:$0xf]
    %v150 = vld [vmem:[%s3 + $0x10] sm:$0xf]
    %v151 = vld [vmem:[%s3 + $0x14] sm:$0xf]
    %v152 = vld [vmem:[%s3 + $0x18] sm:$0xf]
    %v153 = vld [vmem:[%s3 + $0x1c] sm:$0xf]
    %v154 = vld [vmem:[%s3 + $0x20] sm:$0xf]
    %v155 = vld [vmem:[%s3 + $0x24] sm:$0xf]
    %v156 = vld [vmem:[%s3 + $0x28] sm:$0xf]
    %v157 = vld [vmem:[%s3 + $0x2c] sm:$0xf]
    %v158 = vld [vmem:[%s3 + $0x30] sm:$0xf]
    %v159 = vld [vmem:[%s3 + $0x34] sm:$0xf]
    %v160 = vld [vmem:[%s3 + $0x38] sm:$0xf]
    %v161 = vld [vmem:[%s3 + $0x3c] sm:$0xf]
    %v162 = vld [vmem:[%s4] sm:$0x1]
    %v164 = vlaneseq
    %v165 = vshrl.u32 %v164, 7
    %v166 = vsub.s32 0, %v165
    %v167 = vrot.slane %v162, %v166
    %v185 = vunpack.c.l.b16 %v146
    %v186 = vunpack.c.l.b16 %v147
    %v187 = vunpack.c.l.b16 %v148
    %v188 = vunpack.c.l.b16 %v149
    %v189 = vunpack.c.l.b16 %v150
    %v190 = vunpack.c.l.b16 %v151
    %v191 = vunpack.c.l.b16 %v152
    %v192 = vunpack.c.l.b16 %v153
    %v193 = vunpack.c.l.b16 %v154
    %v194 = vunpack.c.l.b16 %v155
    %v195 = vunpack.c.l.b16 %v156
    %v196 = vunpack.c.l.b16 %v157
    %v197 = vunpack.c.l.b16 %v158
    %v198 = vunpack.c.l.b16 %v159
    %v199 = vunpack.c.l.b16 %v160
    %v200 = vunpack.c.l.b16 %v161
    %v201 = vpack.c.b16 %v186, %v185
    %v202 = vpack.c.b16 %v188, %v187
    %v203 = vpack.c.b16 %v190, %v189
    %v204 = vpack.c.b16 %v192, %v191
    %v205 = vpack.c.b16 %v194, %v193
    %v206 = vpack.c.b16 %v196, %v195
    %v207 = vpack.c.b16 %v198, %v197
    %v208 = vpack.c.b16 %v200, %v199
    %217 = vmatprep.subr.bf16.mxu0 0
    %218 = vmatpush1.bf16.msra.mxu0 %v201
    %219 = vmatprep.subr.bf16.mxu0 0
    %220 = vmatpush1.bf16.msra.mxu0 %v202
    %221 = vmatprep.subr.bf16.mxu0 0
    %222 = vmatpush1.bf16.msra.mxu0 %v203
    %223 = vmatprep.subr.bf16.mxu0 0
    %224 = vmatpush1.bf16.msra.mxu0 %v204
    %225 = vmatprep.subr.bf16.mxu0 0
    %226 = vmatpush1.bf16.msra.mxu0 %v205
    %227 = vmatprep.subr.bf16.mxu0 0
    %228 = vmatpush1.bf16.msra.mxu0 %v206
    %229 = vmatprep.subr.bf16.mxu0 0
    %230 = vmatpush1.bf16.msra.mxu0 %v207
    %231 = vmatprep.subr.bf16.mxu0 0
    %232 = vmatpush1.bf16.msra.mxu0 %v208
    %233 = vmatprep.subr.bf16.mxu0 0
    %234 = vmatpush1.bf16.msra.mxu0 0
    %235 = vmatprep.subr.bf16.mxu0 0
    %236 = vmatpush1.bf16.msra.mxu0 0
    %237 = vmatprep.subr.bf16.mxu0 0
    %238 = vmatpush1.bf16.msra.mxu0 0
    %239 = vmatprep.subr.bf16.mxu0 0
    %240 = vmatpush1.bf16.msra.mxu0 0
    %241 = vmatprep.subr.bf16.mxu0 0
    %242 = vmatpush1.bf16.msra.mxu0 0
    %243 = vmatprep.subr.bf16.mxu0 0
    %244 = vmatpush1.bf16.msra.mxu0 0
    %245 = vmatprep.subr.bf16.mxu0 0
    %246 = vmatpush1.bf16.msra.mxu0 0
    %247 = vmatprep.subr.bf16.mxu0 0
    %248 = vmatpush1.bf16.msra.mxu0 0
    %249 = vmatprep.mubr.bf16.mxu0 0
    %250 = vmatmul.mubr.bf16.gmra.mrb[0].mxu0 %v145
    %v251 = vpop.f32.mrb[0].mxu0
    %v252 = vadd.f32 %v167, %v251
    %v253 = vpop.f32.mrb[0].mxu0
    %v254 = vpop.f32.mrb[0].mxu0
    %v255 = vadd.f32 %v167, %v254
    %v256 = vpop.f32.mrb[0].mxu0
    %257 = vdwg.mxu0
    %258 = vst.msk [vmem:[#allocation2] sm:$0xff] %vm48, %v252
    %259 = vst.msk [vmem:[#allocation2 + $0x8] sm:$0xff] %vm48, %v255
    // Predicated region
    $region22: #{mlp_forward.1} parent=1 // pred_check
      _
    $region23: #{mlp_forward.1} parent=1 // pred_check_branch
      %261 = sbr.rel (0) target = $region25
    $region24: #{mlp_forward.1} parent=1 // pred_region
      %s263 = ssub.s32 256, 256
      %264 = vsyncadd [#allocation3], %s263
      %s265 = sshll.u32 [#allocation2], 4
      %s266 = int_to_ptr.vmem [resolvable:$true] %s265
      %271 = dma.vmem_to_hbm [thread:$0]  %s266, 256, %s5, [#allocation3], 128, 128, 8
    $region25: #{mlp_forward.1} parent=1 // pred_fallthru
      _
    // Predicated region
    $region26: #{mlp_forward.1} parent=1 // pred_check
      _
    $region27: #{mlp_forward.1} parent=1 // pred_check_branch
      %273 = sbr.rel (0) target = $region29
    $region28: #{mlp_forward.1} parent=1 // pred_region
      %274 = dma.done [#allocation3], 256
    $region29: #{mlp_forward.1} parent=1 // pred_fallthru
      _
    %275 = vsyncpa [#allocation3], 1

</llo_original>
